<compile_context>
chip_gen: v7x
topology: tpu7x:2x2x1
jax: 0.10.0
libtpu: 0.0.40
codegen_flags: <defaults>
</compile_context>

<pallas_src>
import functools
import math

import jax
import jax.numpy as jnp
from jax.experimental import pallas as pl
from jax.experimental.pallas import tpu as pltpu

_IN_EPS = 1e-3   # nn.InstanceNorm2d(in_channel, eps=0.001)
_BN_EPS = 1e-5   # nn.BatchNorm2d default eps


# --------------------------------------------------------------------------
# Tile planning (per-generation VMEM budget, lane-dense blocks, G >= 2)
# --------------------------------------------------------------------------
def _vmem_budget_and_limit():
    """(per-step working-set budget, scoped-VMEM limit) for this TPU generation."""
    try:
        phys = int(pltpu.get_tpu_info().vmem_capacity_bytes)
    except Exception:                       # not queryable: assume v7x's 64 MiB
        phys = 64 * 1024 * 1024
    budget = int(phys * 0.40)               # ~25 MiB on v7x, ~51 MiB on v5e/v6e
    limit = min(int(phys * 0.85), 96 * 1024 * 1024)
    return budget, limit


def _divisors(n):
    return [d for d in range(1, n + 1) if n % d == 0]


def _fold_workset_bytes(bt, npad, c_in, c_down, p, in_bytes, out_bytes):
    lanes = bt * npad
    blocks = 2 * (c_in * lanes * in_bytes + c_down * bt * p * in_bytes
                  + c_down * lanes * out_bytes)               # double-buffered I/O
    consts = 2 * (bt * p * lanes + 2 * bt * lanes) * 4        # mask + one-hots
    interm = (8 * c_in + 4 * p + 2 * bt * p + 2 * c_down) * lanes * 4
    return blocks + consts + interm


def _nofold_workset_bytes(bt, n, c_in, c_down, p, in_bytes, out_bytes):
    blocks = 2 * bt * (c_in * n * in_bytes + c_down * p * in_bytes
                       + c_down * n * out_bytes)
    interm = bt * (5 * c_in + 4 * p + 2 * c_down) * n * 4
    return blocks + interm


def _plan_fold(batch, n, c_in, c_down, p, in_bytes, out_bytes, budget):
    """Pick (Bt, Np): batch tile + padded point count so Bt*Np % 128 == 0."""
    best = None
    for bt in _divisors(batch):
        q = 128 // math.gcd(bt, 128)                 # Np must be a multiple of q
        npad = -(-n // q) * q
        if _fold_workset_bytes(bt, npad, c_in, c_down, p,
                               in_bytes, out_bytes) > budget:
            continue
        lanes = bt * npad
        key = (npad == n,                            # prefer no lane padding
               batch // bt >= 2 or batch == 1,       # >=2 steps for v7x's 2 TCs
               -abs(lanes - 1024),                   # target ~1K-lane blocks
               bt)
        if best is None or key > best[0]:
            best = (key, bt, npad)
    if best is None:                                 # nothing fits: minimal tile
        return 1, -(-n // 128) * 128
    return best[1], best[2]


def _plan_nofold(batch, n, c_in, c_down, p, in_bytes, out_bytes, budget):
    best = None
    for bt in _divisors(batch):
        if _nofold_workset_bytes(bt, n, c_in, c_down, p,
                                 in_bytes, out_bytes) > budget:
            continue
        key = (batch // bt >= 2 or batch == 1, bt)   # keep G>=2, then largest Bt
        if best is None or key > best[0]:
            best = (key, bt)
    return 1 if best is None else best[1]


# --------------------------------------------------------------------------
# Kernels
# --------------------------------------------------------------------------
def _kernel_nofold(x_ref, xd_ref, a_ref, c_ref, w_ref, b_ref, out_ref, *, mm_dtype):
    """Fast path: block (Bt, C_in, N) with N a multiple of 128 (lane-dense)."""
    x = x_ref[...].astype(jnp.float32)                        # [Bt, C_in, N]
    bt, c_in = x.shape[0], x.shape[1]
    p = w_ref.shape[0]

    # InstanceNorm2d (no affine): per-(b, c) stats over the point/lane axis,
    # fused with the pre-folded eval-mode BatchNorm scale/shift and ReLU.
    mu = jnp.mean(x, axis=-1, keepdims=True)
    d = x - mu
    var = jnp.mean(d * d, axis=-1, keepdims=True)
    h = jnp.maximum(d * (jax.lax.rsqrt(var + _IN_EPS) * a_ref[...][None])
                    + c_ref[...][None], 0.0)                   # [Bt, C_in, N]

    # 1x1 conv == batched [P, C_in] @ [C_in, N] + bias.
    w = jnp.broadcast_to(w_ref[...].astype(mm_dtype)[None], (bt, p, c_in))
    embed = jnp.einsum("bpc,bcn->bpn", w, h.astype(mm_dtype),
                       preferred_element_type=jnp.float32) + b_ref[...][None]

    # softmax over the output_points axis; divide on the EUP.
    e = jnp.exp(embed - jnp.max(embed, axis=1, keepdims=True))
    s = e * pl.reciprocal(jnp.sum(e, axis=1, keepdims=True), approx=True)

    # out = x_down @ S, batched on the MXU.
    out = jnp.einsum("bcp,bpn->bcn", xd_ref[...].astype(mm_dtype),
                     s.astype(mm_dtype), preferred_element_type=jnp.float32)
    out_ref[...] = out.astype(out_ref.dtype)


def _kernel_fold(x_ref, xd_ref, a_ref, c_ref, w_ref, b_ref,
                 seg_ref, segt_ref, mask_ref, out_ref,
                 *, n_points, n_batch_tile, mm_dtype):
    """Fold path: Bt batch elements on the lane axis, L = Bt*Np (mult. of 128)."""
    x = x_ref[0].astype(jnp.float32)                           # [C_in, L]
    c_in = x.shape[0]
    inv_n = 1.0 / n_points

    # InstanceNorm2d stats as MXU segmented sums: [2*C_in, L] @ one-hot [L, Bt].
    stats = jnp.dot(jnp.concatenate([x, x * x], axis=0), seg_ref[...],
                    preferred_element_type=jnp.float32) * inv_n   # [2*C_in, Bt]
    mu = stats[:c_in]
    var = stats[c_in:] - mu * mu                               # biased (PyTorch IN)

    # Fold eval-mode BatchNorm in at [C_in, Bt]; broadcast back to lanes with
    # one tiny matmul; normalize + BN + ReLU in a single VPU pass over x.
    scale = jax.lax.rsqrt(var + _IN_EPS) * a_ref[...]          # [C_in, Bt]
    shift = c_ref[...] - mu * scale                            # [C_in, Bt]
    ss = jnp.dot(jnp.concatenate([scale, shift], axis=0), segt_ref[...],
                 preferred_element_type=jnp.float32)           # [2*C_in, L]
    h = jnp.maximum(x * ss[:c_in] + ss[c_in:], 0.0)

    # 1x1 conv == [P, C_in] @ [C_in, L] + bias.
    embed = jnp.dot(w_ref[...].astype(mm_dtype), h.astype(mm_dtype),
                    preferred_element_type=jnp.float32) + b_ref[...]   # [P, L]

    # softmax over the output_points axis; divide on the EUP.
    e = jnp.exp(embed - jnp.max(embed, axis=0, keepdims=True))
    s = e * pl.reciprocal(jnp.sum(e, axis=0, keepdims=True), approx=True)

    # out = x_down @ S per batch segment, as one lane-dense matmul against the
    # precomputed block-diagonal mask: [C_down, Bt*P] @ [Bt*P, L].
    s_big = (jnp.concatenate([s] * n_batch_tile, axis=0)
             * mask_ref[...]).astype(mm_dtype)
    out = jnp.dot(xd_ref[0].astype(mm_dtype), s_big,
                  preferred_element_type=jnp.float32)          # [C_down, L]
    out_ref[0] = out.astype(out_ref.dtype)


# --------------------------------------------------------------------------
# Wrapper
# --------------------------------------------------------------------------
@jax.jit
def diff_unpool_forward(x_geo, x_down, gamma, beta, rmean, rvar, conv_w, conv_b):
    """x_geo: [B, C_in, N, 1]   x_down: [B, C_down, P, 1]  ->  [B, C_down, N, 1]"""
    B, C_in, N, _ = x_geo.shape
    _, C_down, P, _ = x_down.shape
    out_dtype = x_down.dtype
    mm_dtype = jnp.bfloat16 if x_geo.dtype == jnp.bfloat16 else jnp.float32
    in_bytes = jnp.dtype(x_geo.dtype).itemsize
    out_bytes = jnp.dtype(out_dtype).itemsize
    budget, vmem_limit = _vmem_budget_and_limit()

    # Eval-mode BatchNorm pre-folded into one scale/shift pair.
    a = (gamma.astype(jnp.float32) *
         jax.lax.rsqrt(rvar.astype(jnp.float32) + _BN_EPS)).reshape(C_in, 1)
    c = (beta.astype(jnp.float32).reshape(C_in, 1) -
         rmean.astype(jnp.float32).reshape(C_in, 1) * a)
    w2 = conv_w.reshape(P, C_in).astype(jnp.float32)           # 1x1 conv kernel
    b2 = conv_b.reshape(P, 1).astype(jnp.float32)

    xg = x_geo[..., 0]          # [B, C_in, N]   (HBM dtype kept; no f32 upcast)
    xd = x_down[..., 0]         # [B, C_down, P]

    compiler_params = pltpu.CompilerParams(
        dimension_semantics=("parallel",), vmem_limit_bytes=vmem_limit)
    param_specs = [
        pl.BlockSpec((C_in, 1), lambda g: (0, 0)),             # BN scale a
        pl.BlockSpec((C_in, 1), lambda g: (0, 0)),             # BN shift c
        pl.BlockSpec((P, C_in), lambda g: (0, 0)),             # conv weight
        pl.BlockSpec((P, 1), lambda g: (0, 0)),                # conv bias
    ]

    if N % 128 == 0:
        # ----- fast path: already lane-dense, no folding / no transposes -----
        Bt = _plan_nofold(B, N, C_in, C_down, P, in_bytes, out_bytes, budget)
        kernel = functools.partial(_kernel_nofold, mm_dtype=mm_dtype)
        out = pl.pallas_call(
            kernel,
            out_shape=jax.ShapeDtypeStruct((B, C_down, N), out_dtype),
            grid_spec=pltpu.PrefetchScalarGridSpec(
                num_scalar_prefetch=0,
                grid=(B // Bt,),
                in_specs=[
                    pl.BlockSpec((Bt, C_in, N), lambda g: (g, 0, 0)),
                    pl.BlockSpec((Bt, C_down, P), lambda g: (g, 0, 0)),
                ] + param_specs,
                out_specs=pl.BlockSpec((Bt, C_down, N), lambda g: (g, 0, 0)),
            ),
            compiler_params=compiler_params,
        )(xg, xd, a, c, w2, b2)
        return out[..., None]

    # ----- fold path: batch folded into the lane axis (pad N if needed) -----
    Bt, Np = _plan_fold(B, N, C_in, C_down, P, in_bytes, out_bytes, budget)
    G, L = B // Bt, Bt * Np
    if Np != N:
        xg = jnp.pad(xg, ((0, 0), (0, 0), (0, Np - N)))
    xg_f = xg.reshape(G, Bt, C_in, Np).transpose(0, 2, 1, 3).reshape(G, C_in, L)
    xd_f = xd.reshape(G, Bt, C_down, P).transpose(0, 2, 1, 3).reshape(G, C_down, Bt * P)

    # Constant helper matrices (constant block index -> fetched once).
    lane = jnp.arange(L)
    valid = ((lane % Np) < N).astype(jnp.float32)
    seg_oh = jax.nn.one_hot(lane // Np, Bt, dtype=jnp.float32) * valid[:, None]
    seg_oh_t = seg_oh.T                                               # [Bt, L]
    blk_mask = ((jnp.arange(Bt * P)[:, None] // P == (lane[None, :] // Np))
                .astype(jnp.float32) * valid[None, :])                # [Bt*P, L]

    kernel = functools.partial(_kernel_fold, n_points=N, n_batch_tile=Bt,
                               mm_dtype=mm_dtype)
    out = pl.pallas_call(
        kernel,
        out_shape=jax.ShapeDtypeStruct((G, C_down, L), out_dtype),
        grid_spec=pltpu.PrefetchScalarGridSpec(
            num_scalar_prefetch=0,
            grid=(G,),
            in_specs=[
                pl.BlockSpec((1, C_in, L), lambda g: (g, 0, 0)),        # x (folded)
                pl.BlockSpec((1, C_down, Bt * P), lambda g: (g, 0, 0)), # x_down
            ] + param_specs + [
                pl.BlockSpec((L, Bt), lambda g: (0, 0)),                # one-hot
                pl.BlockSpec((Bt, L), lambda g: (0, 0)),                # one-hot^T
                pl.BlockSpec((Bt * P, L), lambda g: (0, 0)),            # blockdiag mask
            ],
            out_specs=pl.BlockSpec((1, C_down, L), lambda g: (g, 0, 0)),
        ),
        compiler_params=compiler_params,
    )(xg_f, xd_f, a, c, w2, b2, seg_oh, seg_oh_t, blk_mask)

    out = out.reshape(G, C_down, Bt, Np).transpose(0, 2, 1, 3).reshape(B, C_down, Np)
    return out[:, :, :N][..., None]


# --------------------------------------------------------------------------
# Pure-JAX reference mirroring the PyTorch module (eval-mode BatchNorm).
# --------------------------------------------------------------------------
def _reference(x_geo, x_down, gamma, beta, rmean, rvar, conv_w, conv_b):
    B, C_in, N, _ = x_geo.shape
    _, C_down, P, _ = x_down.shape
    x = x_geo[..., 0].astype(jnp.float32)
    mu = x.mean(axis=2, keepdims=True)
    var = ((x - mu) ** 2).mean(axis=2, keepdims=True)
    h = (x - mu) * jax.lax.rsqrt(var + _IN_EPS)
    h = (h - rmean[None, :, None]) * jax.lax.rsqrt(rvar[None, :, None] + _BN_EPS)
    h = h * gamma[None, :, None] + beta[None, :, None]
    h = jnp.maximum(h, 0.0)
    embed = jnp.einsum("pc,bcn->bpn", conv_w.reshape(P, C_in), h) + conv_b[None, :, None]
    s = jax.nn.softmax(embed, axis=1)
    out = jnp.einsum("bcp,bpn->bcn", x_down[..., 0].astype(jnp.float32), s)
    return out[..., None]


if __name__ == "__main__":
    def _run_case(batch, c_in, n_points, out_points, c_down, seed):
        key = jax.random.PRNGKey(seed)
        k1, k2, k3, k4 = jax.random.split(key, 4)
        x_geo = jax.random.normal(k1, (batch, c_in, n_points, 1), dtype=jnp.float32)
        x_down = jax.random.normal(k2, (batch, c_down, out_points, 1), dtype=jnp.float32)
        bn_gamma = jnp.ones((c_in,), jnp.float32)
        bn_beta = jnp.zeros((c_in,), jnp.float32)
        bn_rmean = jnp.zeros((c_in,), jnp.float32)
        bn_rvar = jnp.ones((c_in,), jnp.float32)
        conv_w = jax.random.normal(k3, (out_points, c_in), jnp.float32) / jnp.sqrt(c_in * 1.0)
        conv_b = jax.random.normal(k4, (out_points,), jnp.float32) * 0.01

        out = diff_unpool_forward(x_geo, x_down, bn_gamma, bn_beta,
                                  bn_rmean, bn_rvar, conv_w, conv_b)
        jax.block_until_ready(out)
        assert out.shape == (batch, c_down, n_points, 1), out.shape
        assert bool(jnp.all(jnp.isfinite(out)))
        ref = _reference(x_geo, x_down, bn_gamma, bn_beta,
                         bn_rmean, bn_rvar, conv_w, conv_b)
        max_err = float(jnp.max(jnp.abs(out - ref)))
        assert max_err < 2e-2, f"max abs err vs reference: {max_err}"

    # N not a multiple of 128 -> fold path (batch folded into the lane axis).
    _run_case(batch=2, c_in=16, n_points=64, out_points=8, c_down=32, seed=0)
    # N a multiple of 128 -> lane-dense fast path (no folding, no transposes).
    _run_case(batch=2, c_in=16, n_points=128, out_points=8, c_down=32, seed=1)
    print("KERNEL_OK")
</pallas_src>

<mosaic_0001>
module attributes {stable_mosaic.version = 11 : i64} {
  func.func @_kernel_fold(%arg0: i32, %arg1: memref<1x16x128xf32, #tpu.memory_space<vmem>>, %arg2: memref<1x32x16xf32, #tpu.memory_space<vmem>>, %arg3: memref<16x1xf32, #tpu.memory_space<vmem>>, %arg4: memref<16x1xf32, #tpu.memory_space<vmem>>, %arg5: memref<8x16xf32, #tpu.memory_space<vmem>>, %arg6: memref<8x1xf32, #tpu.memory_space<vmem>>, %arg7: memref<128x2xf32, #tpu.memory_space<vmem>>, %arg8: memref<2x128xf32, #tpu.memory_space<vmem>>, %arg9: memref<16x128xf32, #tpu.memory_space<vmem>>, %arg10: memref<1x32x128xf32, #tpu.memory_space<vmem>>) attributes {dimension_semantics = [#tpu.dimension_semantics<parallel>], iteration_bounds = array<i64: 1>, scalar_prefetch = 0 : i64, scratch_operands = 0 : i64, tpu.core_type = #tpu.core_type<tc>, window_params = [{transform_indices = @transform_0, window_bounds = array<i64: 1, 16, 128>}, {transform_indices = @transform_1, window_bounds = array<i64: 1, 32, 16>}, {pipeline_mode = #tpu.pipeline_mode<synchronous>, transform_indices = @transform_2, window_bounds = array<i64: 16, 1>}, {pipeline_mode = #tpu.pipeline_mode<synchronous>, transform_indices = @transform_3, window_bounds = array<i64: 16, 1>}, {pipeline_mode = #tpu.pipeline_mode<synchronous>, transform_indices = @transform_4, window_bounds = array<i64: 8, 16>}, {pipeline_mode = #tpu.pipeline_mode<synchronous>, transform_indices = @transform_5, window_bounds = array<i64: 8, 1>}, {pipeline_mode = #tpu.pipeline_mode<synchronous>, transform_indices = @transform_6, window_bounds = array<i64: 128, 2>}, {pipeline_mode = #tpu.pipeline_mode<synchronous>, transform_indices = @transform_7, window_bounds = array<i64: 2, 128>}, {pipeline_mode = #tpu.pipeline_mode<synchronous>, transform_indices = @transform_8, window_bounds = array<i64: 16, 128>}, {transform_indices = @transform_9, window_bounds = array<i64: 1, 32, 128>}]} {
    %c0 = arith.constant 0 : index
    %c0_0 = arith.constant 0 : index
    %c0_1 = arith.constant 0 : index
    %0 = vector.load %arg1[%c0, %c0_0, %c0_1] : memref<1x16x128xf32, #tpu.memory_space<vmem>>, vector<1x16x128xf32>
    %1 = vector.shape_cast %0 : vector<1x16x128xf32> to vector<16x128xf32>
    %2 = arith.mulf %1, %1 : vector<16x128xf32>
    %3 = tpu.concatenate %1, %2 in 0 : vector<16x128xf32>, vector<16x128xf32> -> vector<32x128xf32>
    %c0_2 = arith.constant 0 : index
    %c0_3 = arith.constant 0 : index
    %4 = vector.load %arg7[%c0_2, %c0_3] : memref<128x2xf32, #tpu.memory_space<vmem>>, vector<128x2xf32>
    %cst = arith.constant dense<0.000000e+00> : vector<32x2xf32>
    %5 = tpu.matmul %3, %4, %cst {dimension_numbers = #tpu.dot_dimension_numbers<[1], [0], [0], [1], [0, 0, 1, 1], [], []>} : vector<32x128xf32>, vector<128x2xf32>, vector<32x2xf32> -> vector<32x2xf32>
    %cst_4 = arith.constant 1.562500e-02 : f32
    %6 = vector.broadcast %cst_4 : f32 to vector<32x2xf32>
    %7 = arith.mulf %5, %6 : vector<32x2xf32>
    %8 = vector.extract_strided_slice %7 {offsets = [0, 0], sizes = [16, 2], strides = [1, 1]} : vector<32x2xf32> to vector<16x2xf32>
    %9 = vector.extract_strided_slice %7 {offsets = [16, 0], sizes = [16, 2], strides = [1, 1]} : vector<32x2xf32> to vector<16x2xf32>
    %10 = arith.mulf %8, %8 : vector<16x2xf32>
    %11 = arith.subf %9, %10 : vector<16x2xf32>
    %cst_5 = arith.constant 1.000000e-03 : f32
    %12 = vector.broadcast %cst_5 : f32 to vector<16x2xf32>
    %13 = arith.addf %11, %12 : vector<16x2xf32>
    %14 = math.rsqrt %13 : vector<16x2xf32>
    %c0_6 = arith.constant 0 : index
    %c0_7 = arith.constant 0 : index
    %15 = vector.load %arg3[%c0_6, %c0_7] : memref<16x1xf32, #tpu.memory_space<vmem>>, vector<16x1xf32>
    %16 = vector.broadcast %15 : vector<16x1xf32> to vector<16x2xf32>
    %17 = arith.mulf %14, %16 : vector<16x2xf32>
    %c0_8 = arith.constant 0 : index
    %c0_9 = arith.constant 0 : index
    %18 = vector.load %arg4[%c0_8, %c0_9] : memref<16x1xf32, #tpu.memory_space<vmem>>, vector<16x1xf32>
    %19 = arith.mulf %8, %17 : vector<16x2xf32>
    %20 = vector.broadcast %18 : vector<16x1xf32> to vector<16x2xf32>
    %21 = arith.subf %20, %19 : vector<16x2xf32>
    %22 = tpu.concatenate %17, %21 in 0 : vector<16x2xf32>, vector<16x2xf32> -> vector<32x2xf32>
    %c0_10 = arith.constant 0 : index
    %c0_11 = arith.constant 0 : index
    %23 = vector.load %arg8[%c0_10, %c0_11] : memref<2x128xf32, #tpu.memory_space<vmem>>, vector<2x128xf32>
    %cst_12 = arith.constant dense<0.000000e+00> : vector<32x128xf32>
    %24 = tpu.matmul %22, %23, %cst_12 {dimension_numbers = #tpu.dot_dimension_numbers<[1], [0], [0], [1], [0, 0, 1, 1], [], []>} : vector<32x2xf32>, vector<2x128xf32>, vector<32x128xf32> -> vector<32x128xf32>
    %25 = vector.extract_strided_slice %24 {offsets = [0, 0], sizes = [16, 128], strides = [1, 1]} : vector<32x128xf32> to vector<16x128xf32>
    %26 = arith.mulf %1, %25 : vector<16x128xf32>
    %27 = vector.extract_strided_slice %24 {offsets = [16, 0], sizes = [16, 128], strides = [1, 1]} : vector<32x128xf32> to vector<16x128xf32>
    %28 = arith.addf %26, %27 : vector<16x128xf32>
    %cst_13 = arith.constant 0.000000e+00 : f32
    %29 = vector.broadcast %cst_13 : f32 to vector<16x128xf32>
    %30 = arith.maximumf %28, %29 : vector<16x128xf32>
    %c0_14 = arith.constant 0 : index
    %c0_15 = arith.constant 0 : index
    %31 = vector.load %arg5[%c0_14, %c0_15] : memref<8x16xf32, #tpu.memory_space<vmem>>, vector<8x16xf32>
    %cst_16 = arith.constant dense<0.000000e+00> : vector<8x128xf32>
    %32 = tpu.matmul %31, %30, %cst_16 {dimension_numbers = #tpu.dot_dimension_numbers<[1], [0], [0], [1], [0, 0, 1, 1], [], []>} : vector<8x16xf32>, vector<16x128xf32>, vector<8x128xf32> -> vector<8x128xf32>
    %c0_17 = arith.constant 0 : index
    %c0_18 = arith.constant 0 : index
    %33 = vector.load %arg6[%c0_17, %c0_18] : memref<8x1xf32, #tpu.memory_space<vmem>>, vector<8x1xf32>
    %34 = vector.broadcast %33 : vector<8x1xf32> to vector<8x128xf32>
    %35 = arith.addf %32, %34 : vector<8x128xf32>
    %cst_19 = arith.constant dense<0xFF800000> : vector<128xf32>
    %36 = vector.multi_reduction <maximumf>, %35, %cst_19 [0] : vector<8x128xf32> to vector<128xf32>
    %37 = vector.shape_cast %36 : vector<128xf32> to vector<1x128xf32>
    %38 = vector.broadcast %37 : vector<1x128xf32> to vector<8x128xf32>
    %39 = arith.subf %35, %38 : vector<8x128xf32>
    %40 = math.exp %39 : vector<8x128xf32>
    %cst_20 = arith.constant dense<0.000000e+00> : vector<128xf32>
    %41 = vector.multi_reduction <add>, %40, %cst_20 [0] : vector<8x128xf32> to vector<128xf32>
    %42 = vector.shape_cast %41 : vector<128xf32> to vector<1x128xf32>
    %43 = tpu.reciprocal %42 {approx = true} : vector<1x128xf32> -> vector<1x128xf32>
    %44 = vector.broadcast %43 : vector<1x128xf32> to vector<8x128xf32>
    %45 = arith.mulf %40, %44 : vector<8x128xf32>
    %46 = tpu.concatenate %45, %45 in 0 : vector<8x128xf32>, vector<8x128xf32> -> vector<16x128xf32>
    %c0_21 = arith.constant 0 : index
    %c0_22 = arith.constant 0 : index
    %47 = vector.load %arg9[%c0_21, %c0_22] : memref<16x128xf32, #tpu.memory_space<vmem>>, vector<16x128xf32>
    %48 = arith.mulf %46, %47 : vector<16x128xf32>
    %c0_23 = arith.constant 0 : index
    %c0_24 = arith.constant 0 : index
    %c0_25 = arith.constant 0 : index
    %49 = vector.load %arg2[%c0_23, %c0_24, %c0_25] : memref<1x32x16xf32, #tpu.memory_space<vmem>>, vector<1x32x16xf32>
    %50 = vector.shape_cast %49 : vector<1x32x16xf32> to vector<32x16xf32>
    %cst_26 = arith.constant dense<0.000000e+00> : vector<32x128xf32>
    %51 = tpu.matmul %50, %48, %cst_26 {dimension_numbers = #tpu.dot_dimension_numbers<[1], [0], [0], [1], [0, 0, 1, 1], [], []>} : vector<32x16xf32>, vector<16x128xf32>, vector<32x128xf32> -> vector<32x128xf32>
    %c0_27 = arith.constant 0 : index
    %c0_28 = arith.constant 0 : index
    %c0_29 = arith.constant 0 : index
    %52 = vector.load %arg10[%c0_27, %c0_28, %c0_29] : memref<1x32x128xf32, #tpu.memory_space<vmem>>, vector<1x32x128xf32>
    %53 = vector.shape_cast %52 : vector<1x32x128xf32> to vector<32x128xf32>
    %54 = vector.shape_cast %51 : vector<32x128xf32> to vector<1x32x128xf32>
    tpu.vector_store %arg10[%c0_27, %c0_28, %c0_29], %54 {strides = array<i32>} : memref<1x32x128xf32, #tpu.memory_space<vmem>>, vector<1x32x128xf32>,
    return
  }
  func.func @transform_0(%arg0: i32) -> (i32, i32, i32) {
    %c0_i32 = arith.constant 0 : i32
    %c0_i32_0 = arith.constant 0 : i32
    %c0_i32_1 = arith.constant 0 : i32
    return %arg0, %c0_i32, %c0_i32_0 : i32, i32, i32
  }
  func.func @transform_1(%arg0: i32) -> (i32, i32, i32) {
    %c0_i32 = arith.constant 0 : i32
    %c0_i32_0 = arith.constant 0 : i32
    %c0_i32_1 = arith.constant 0 : i32
    return %arg0, %c0_i32, %c0_i32_0 : i32, i32, i32
  }
  func.func @transform_2(%arg0: i32) -> (i32, i32) {
    %c0_i32 = arith.constant 0 : i32
    %c0_i32_0 = arith.constant 0 : i32
    %c0_i32_1 = arith.constant 0 : i32
    return %c0_i32, %c0_i32_0 : i32, i32
  }
  func.func @transform_3(%arg0: i32) -> (i32, i32) {
    %c0_i32 = arith.constant 0 : i32
    %c0_i32_0 = arith.constant 0 : i32
    %c0_i32_1 = arith.constant 0 : i32
    return %c0_i32, %c0_i32_0 : i32, i32
  }
  func.func @transform_4(%arg0: i32) -> (i32, i32) {
    %c0_i32 = arith.constant 0 : i32
    %c0_i32_0 = arith.constant 0 : i32
    %c0_i32_1 = arith.constant 0 : i32
    return %c0_i32, %c0_i32_0 : i32, i32
  }
  func.func @transform_5(%arg0: i32) -> (i32, i32) {
    %c0_i32 = arith.constant 0 : i32
    %c0_i32_0 = arith.constant 0 : i32
    %c0_i32_1 = arith.constant 0 : i32
    return %c0_i32, %c0_i32_0 : i32, i32
  }
  func.func @transform_6(%arg0: i32) -> (i32, i32) {
    %c0_i32 = arith.constant 0 : i32
    %c0_i32_0 = arith.constant 0 : i32
    %c0_i32_1 = arith.constant 0 : i32
    return %c0_i32, %c0_i32_0 : i32, i32
  }
  func.func @transform_7(%arg0: i32) -> (i32, i32) {
    %c0_i32 = arith.constant 0 : i32
    %c0_i32_0 = arith.constant 0 : i32
    %c0_i32_1 = arith.constant 0 : i32
    return %c0_i32, %c0_i32_0 : i32, i32
  }
  func.func @transform_8(%arg0: i32) -> (i32, i32) {
    %c0_i32 = arith.constant 0 : i32
    %c0_i32_0 = arith.constant 0 : i32
    %c0_i32_1 = arith.constant 0 : i32
    return %c0_i32, %c0_i32_0 : i32, i32
  }
  func.func @transform_9(%arg0: i32) -> (i32, i32, i32) {
    %c0_i32 = arith.constant 0 : i32
    %c0_i32_0 = arith.constant 0 : i32
    %c0_i32_1 = arith.constant 0 : i32
    return %arg0, %c0_i32, %c0_i32_0 : i32, i32, i32
  }
}

</mosaic_0001>

<llo_original>
// kernel: diff_unpool_forward.1
$region0: #{diff_unpool_forward.1}
  #allocation0 [shape = 'u32[]', space=smem, size = 0x4, offset = 0x4, fixed_abs, tag = 'smem constant byte address 0x4 - core index']
  #allocation1 [shape = 'u32[144,128]{1,0:T(1,128)}', space=vmem, size = 0x12000, scoped, tag = 'internal scratch']
  %s0 = inlined_call_operand.vmem [shape: f32[1,16,128], index: 0, kind: input, shape index: {}]
  %s1 = inlined_call_operand.vmem [shape: f32[1,32,16], index: 1, kind: input, shape index: {}]
  %s2 = inlined_call_operand.vmem [shape: f32[16,1], index: 2, kind: input, shape index: {}]
  %s3 = inlined_call_operand.vmem [shape: f32[16,1], index: 3, kind: input, shape index: {}]
  %s4 = inlined_call_operand.vmem [shape: f32[8,16], index: 4, kind: input, shape index: {}]
  %s5 = inlined_call_operand.vmem [shape: f32[8,1], index: 5, kind: input, shape index: {}]
  %s6 = inlined_call_operand.vmem [shape: f32[128,2], index: 6, kind: input, shape index: {}]
  %s7 = inlined_call_operand.vmem [shape: f32[2,128], index: 7, kind: input, shape index: {}]
  %s8 = inlined_call_operand.vmem [shape: f32[16,128], index: 8, kind: input, shape index: {}]
  %s9 = inlined_call_operand.vmem [shape: f32[1,32,128], index: 9, kind: output, shape index: {}]
  %s10 = sld [smem:[#allocation0]]
  $region46: #{diff_unpool_forward.1} parent=0
    _
  %s12 = ssub.s32 1, %s10
  %s13 = scalar_select 0, %s12, %s10
  // Predicated region
  $region2: #{diff_unpool_forward.1} parent=0 // pred_check
    _
  $region3: #{diff_unpool_forward.1} parent=0 // pred_check_branch
    %15 = sbr.rel (0) target = $region5
  $region4: #{diff_unpool_forward.1} parent=0 // pred_region
    _
  $region5: #{diff_unpool_forward.1} parent=0 // pred_fallthru
    _
  // Predicated region
  $region6: #{diff_unpool_forward.1} parent=0 // pred_check
    _
  $region7: #{diff_unpool_forward.1} parent=0 // pred_check_branch
    %17 = sbr.rel (0) target = $region9
  $region8: #{diff_unpool_forward.1} parent=0 // pred_region
    _
  $region9: #{diff_unpool_forward.1} parent=0 // pred_fallthru
    _
  // Predicated region
  $region10: #{diff_unpool_forward.1} parent=0 // pred_check
    _
  $region11: #{diff_unpool_forward.1} parent=0 // pred_check_branch
    %19 = sbr.rel (0) target = $region13
  $region12: #{diff_unpool_forward.1} parent=0 // pred_region
    _
  $region13: #{diff_unpool_forward.1} parent=0 // pred_fallthru
    _
  // Predicated region
  $region14: #{diff_unpool_forward.1} parent=0 // pred_check
    _
  $region15: #{diff_unpool_forward.1} parent=0 // pred_check_branch
    %21 = sbr.rel (0) target = $region17
  $region16: #{diff_unpool_forward.1} parent=0 // pred_region
    _
  $region17: #{diff_unpool_forward.1} parent=0 // pred_fallthru
    _
  // Predicated region
  $region18: #{diff_unpool_forward.1} parent=0 // pred_check
    _
  $region19: #{diff_unpool_forward.1} parent=0 // pred_check_branch
    %23 = sbr.rel (0) target = $region21
  $region20: #{diff_unpool_forward.1} parent=0 // pred_region
    _
  $region21: #{diff_unpool_forward.1} parent=0 // pred_fallthru
    _
  // Predicated region
  $region22: #{diff_unpool_forward.1} parent=0 // pred_check
    _
  $region23: #{diff_unpool_forward.1} parent=0 // pred_check_branch
    %25 = sbr.rel (0) target = $region25
  $region24: #{diff_unpool_forward.1} parent=0 // pred_region
    _
  $region25: #{diff_unpool_forward.1} parent=0 // pred_fallthru
    _
  // Predicated region
  $region26: #{diff_unpool_forward.1} parent=0 // pred_check
    _
  $region27: #{diff_unpool_forward.1} parent=0 // pred_check_branch
    %27 = sbr.rel (0) target = $region29
  $region28: #{diff_unpool_forward.1} parent=0 // pred_region
    _
  $region29: #{diff_unpool_forward.1} parent=0 // pred_fallthru
    _
  // Predicated region
  $region30: #{diff_unpool_forward.1} parent=0 // pred_check
    _
  $region31: #{diff_unpool_forward.1} parent=0 // pred_check_branch
    %29 = sbr.rel (0) target = $region33
  $region32: #{diff_unpool_forward.1} parent=0 // pred_region
    _
  $region33: #{diff_unpool_forward.1} parent=0 // pred_fallthru
    _
  // Predicated region
  $region34: #{diff_unpool_forward.1} parent=0 // pred_check
    _
  $region35: #{diff_unpool_forward.1} parent=0 // pred_check_branch
    %31 = sbr.rel (0) target = $region37
  $region36: #{diff_unpool_forward.1} parent=0 // pred_region
    _
  $region37: #{diff_unpool_forward.1} parent=0 // pred_fallthru
    _
  %v32 = vld [vmem:[%s0] sm:$0xff]
  %v33 = vld [vmem:[%s0 + $0x8] sm:$0xff]
  %v34 = vmul.f32 %v32, %v32
  %v35 = vmul.f32 %v33, %v33
  %v36 = vld [vmem:[%s6] sm:$0xff]
  %v37 = vld [vmem:[%s6 + $0x8] sm:$0xff]
  %v38 = vld [vmem:[%s6 + $0x10] sm:$0xff]
  %v39 = vld [vmem:[%s6 + $0x18] sm:$0xff]
  %v40 = vld [vmem:[%s6 + $0x20] sm:$0xff]
  %v41 = vld [vmem:[%s6 + $0x28] sm:$0xff]
  %v42 = vld [vmem:[%s6 + $0x30] sm:$0xff]
  %v43 = vld [vmem:[%s6 + $0x38] sm:$0xff]
  %v44 = vld [vmem:[%s6 + $0x40] sm:$0xff]
  %v45 = vld [vmem:[%s6 + $0x48] sm:$0xff]
  %v46 = vld [vmem:[%s6 + $0x50] sm:$0xff]
  %v47 = vld [vmem:[%s6 + $0x58] sm:$0xff]
  %v48 = vld [vmem:[%s6 + $0x60] sm:$0xff]
  %v49 = vld [vmem:[%s6 + $0x68] sm:$0xff]
  %v50 = vld [vmem:[%s6 + $0x70] sm:$0xff]
  %v51 = vld [vmem:[%s6 + $0x78] sm:$0xff]
  %52 = vmatprep.subr.mxu0 0.0
  %53 = vmatpush1.msra.mxu0 %v36
  %54 = vmatprep.subr.mxu0 0.0
  %55 = vmatpush1.msra.mxu0 %v37
  %56 = vmatprep.subr.mxu0 0.0
  %57 = vmatpush1.msra.mxu0 %v38
  %58 = vmatprep.subr.mxu0 0.0
  %59 = vmatpush1.msra.mxu0 %v39
  %60 = vmatprep.subr.mxu0 0.0
  %61 = vmatpush1.msra.mxu0 %v40
  %62 = vmatprep.subr.mxu0 0.0
  %63 = vmatpush1.msra.mxu0 %v41
  %64 = vmatprep.subr.mxu0 0.0
  %65 = vmatpush1.msra.mxu0 %v42
  %66 = vmatprep.subr.mxu0 0.0
  %67 = vmatpush1.msra.mxu0 %v43
  %68 = vmatprep.subr.mxu0 0.0
  %69 = vmatpush1.msra.mxu0 %v44
  %70 = vmatprep.subr.mxu0 0.0
  %71 = vmatpush1.msra.mxu0 %v45
  %72 = vmatprep.subr.mxu0 0.0
  %73 = vmatpush1.msra.mxu0 %v46
  %74 = vmatprep.subr.mxu0 0.0
  %75 = vmatpush1.msra.mxu0 %v47
  %76 = vmatprep.subr.mxu0 0.0
  %77 = vmatpush1.msra.mxu0 %v48
  %78 = vmatprep.subr.mxu0 0.0
  %79 = vmatpush1.msra.mxu0 %v49
  %80 = vmatprep.subr.mxu0 0.0
  %81 = vmatpush1.msra.mxu0 %v50
  %82 = vmatprep.subr.mxu0 0.0
  %83 = vmatpush1.msra.mxu0 %v51
  %84 = vmatprep.subr.mxu0 0.0
  %85 = vmatpush1.msra.mxu0 0.0
  %86 = vmatprep.subr.mxu0 0.0
  %87 = vmatpush1.msra.mxu0 0.0
  %88 = vmatprep.subr.mxu0 0.0
  %89 = vmatpush1.msra.mxu0 0.0
  %90 = vmatprep.subr.mxu0 0.0
  %91 = vmatpush1.msra.mxu0 0.0
  %92 = vmatprep.subr.mxu0 0.0
  %93 = vmatpush1.msra.mxu0 0.0
  %94 = vmatprep.subr.mxu0 0.0
  %95 = vmatpush1.msra.mxu0 0.0
  %96 = vmatprep.subr.mxu0 0.0
  %97 = vmatpush1.msra.mxu0 0.0
  %98 = vmatprep.subr.mxu0 0.0
  %99 = vmatpush1.msra.mxu0 0.0
  %100 = vmatprep.subr.mxu0 0.0
  %101 = vmatpush1.msra.mxu0 0.0
  %102 = vmatprep.subr.mxu0 0.0
  %103 = vmatpush1.msra.mxu0 0.0
  %104 = vmatprep.subr.mxu0 0.0
  %105 = vmatpush1.msra.mxu0 0.0
  %106 = vmatprep.subr.mxu0 0.0
  %107 = vmatpush1.msra.mxu0 0.0
  %108 = vmatprep.subr.mxu0 0.0
  %109 = vmatpush1.msra.mxu0 0.0
  %110 = vmatprep.subr.mxu0 0.0
  %111 = vmatpush1.msra.mxu0 0.0
  %112 = vmatprep.subr.mxu0 0.0
  %113 = vmatpush1.msra.mxu0 0.0
  %114 = vmatprep.subr.mxu0 0.0
  %115 = vmatpush1.msra.mxu0 0.0
  %116 = vmatprep.mubr.f32.mxu0 0.0
  %117 = vmatmul.mubr.f32.gmra.mrb[0].mxu0 %v32
  %v118 = vpop.f32.mrb[0].mxu0
  %v119 = vadd.f32 0.0, %v118
  %v120 = vpop.f32.mrb[0].mxu0
  %121 = vmatprep.mubr.f32.mxu0 0.0
  %122 = vmatmul.mubr.f32.gmra.mrb[0].mxu0 %v33
  %v123 = vpop.f32.mrb[0].mxu0
  %v124 = vadd.f32 0.0, %v123
  %v125 = vpop.f32.mrb[0].mxu0
  %126 = vmatprep.mubr.f32.mxu0 0.0
  %127 = vmatmul.mubr.f32.gmra.mrb[0].mxu0 %v34
  %v128 = vpop.f32.mrb[0].mxu0
  %v129 = vadd.f32 0.0, %v128
  %v130 = vpop.f32.mrb[0].mxu0
  %131 = vmatprep.mubr.f32.mxu0 0.0
  %132 = vmatmul.mubr.f32.gmra.mrb[0].mxu0 %v35
  %v133 = vpop.f32.mrb[0].mxu0
  %v134 = vadd.f32 0.0, %v133
  %v135 = vpop.f32.mrb[0].mxu0
  %136 = vdwg.mxu0
  %v137 = vmul.f32 %v119, 0.015625
  %v138 = vmul.f32 %v124, 0.015625
  %v139 = vmul.f32 %v129, 0.015625
  %v140 = vmul.f32 %v134, 0.015625
  %v141 = vmul.f32 %v137, %v137
  %v142 = vmul.f32 %v138, %v138
  %v143 = vsub.f32 %v139, %v141
  %v144 = vsub.f32 %v140, %v142
  %v145 = vadd.f32 %v143, 0.001
  %v146 = vadd.f32 %v144, 0.001
  %v147 = vrsqrt.pop %v145
  %v148 = vrsqrt.pop %v146
  %v149 = vld [vmem:[%s2] sm:$0xff]
  %v150 = vld [vmem:[%s2 + $0x8] sm:$0xff]
  %152 = vset.pattern.permute.xlu0 0
  %153 = vperm.xlu0 %152, %v149
  %v154 = vpop.permute.xlu0 %153
  %157 = vset.pattern.permute.xlu0 0
  %158 = vperm.xlu0 %157, %v150
  %v159 = vpop.permute.xlu0 %158
  %v161 = vmul.f32 %v147, %v154
  %v162 = vmul.f32 %v148, %v159
  %v163 = vld [vmem:[%s3] sm:$0xff]
  %v164 = vld [vmem:[%s3 + $0x8] sm:$0xff]
  %v165 = vmul.f32 %v137, %v161
  %v166 = vmul.f32 %v138, %v162
  %168 = vset.pattern.permute.xlu0 0
  %169 = vperm.xlu0 %168, %v163
  %v170 = vpop.permute.xlu0 %169
  %173 = vset.pattern.permute.xlu0 0
  %174 = vperm.xlu0 %173, %v164
  %v175 = vpop.permute.xlu0 %174
  %v177 = vsub.f32 %v170, %v165
  %v178 = vsub.f32 %v175, %v166
  %v179 = vld [vmem:[%s7] sm:$0x3]
  %vm180 = vcmask 15360
  %v182 = vsel %vm180, %v161, 0
  %v185 = vsel %vm180, %v162, 0
  %v188 = vsel %vm180, %v177, 0
  %v191 = vsel %vm180, %v178, 0
  %vm193 = vcmask 1041408
  %v195 = vsel %vm193, %v179, 0
  %197 = vmatprep.subr.mxu0 0.0
  %198 = vmatpush1.msra.mxu0 %v195
  %199 = vmatprep.subr.mxu0 0.0
  %200 = vmatpush1.msra.mxu0 0.0
  %201 = vmatprep.subr.mxu0 0.0
  %202 = vmatpush1.msra.mxu0 0.0
  %203 = vmatprep.subr.mxu0 0.0
  %204 = vmatpush1.msra.mxu0 0.0
  %205 = vmatprep.subr.mxu0 0.0
  %206 = vmatpush1.msra.mxu0 0.0
  %207 = vmatprep.subr.mxu0 0.0
  %208 = vmatpush1.msra.mxu0 0.0
  %209 = vmatprep.subr.mxu0 0.0
  %210 = vmatpush1.msra.mxu0 0.0
  %211 = vmatprep.subr.mxu0 0.0
  %212 = vmatpush1.msra.mxu0 0.0
  %213 = vmatprep.subr.mxu0 0.0
  %214 = vmatpush1.msra.mxu0 0.0
  %215 = vmatprep.subr.mxu0 0.0
  %216 = vmatpush1.msra.mxu0 0.0
  %217 = vmatprep.subr.mxu0 0.0
  %218 = vmatpush1.msra.mxu0 0.0
  %219 = vmatprep.subr.mxu0 0.0
  %220 = vmatpush1.msra.mxu0 0.0
  %221 = vmatprep.subr.mxu0 0.0
  %222 = vmatpush1.msra.mxu0 0.0
  %223 = vmatprep.subr.mxu0 0.0
  %224 = vmatpush1.msra.mxu0 0.0
  %225 = vmatprep.subr.mxu0 0.0
  %226 = vmatpush1.msra.mxu0 0.0
  %227 = vmatprep.subr.mxu0 0.0
  %228 = vmatpush1.msra.mxu0 0.0
  %229 = vmatprep.subr.mxu0 0.0
  %230 = vmatpush1.msra.mxu0 0.0
  %231 = vmatprep.subr.mxu0 0.0
  %232 = vmatpush1.msra.mxu0 0.0
  %233 = vmatprep.subr.mxu0 0.0
  %234 = vmatpush1.msra.mxu0 0.0
  %235 = vmatprep.subr.mxu0 0.0
  %236 = vmatpush1.msra.mxu0 0.0
  %237 = vmatprep.subr.mxu0 0.0
  %238 = vmatpush1.msra.mxu0 0.0
  %239 = vmatprep.subr.mxu0 0.0
  %240 = vmatpush1.msra.mxu0 0.0
  %241 = vmatprep.subr.mxu0 0.0
  %242 = vmatpush1.msra.mxu0 0.0
  %243 = vmatprep.subr.mxu0 0.0
  %244 = vmatpush1.msra.mxu0 0.0
  %245 = vmatprep.subr.mxu0 0.0
  %246 = vmatpush1.msra.mxu0 0.0
  %247 = vmatprep.subr.mxu0 0.0
  %248 = vmatpush1.msra.mxu0 0.0
  %249 = vmatprep.subr.mxu0 0.0
  %250 = vmatpush1.msra.mxu0 0.0
  %251 = vmatprep.subr.mxu0 0.0
  %252 = vmatpush1.msra.mxu0 0.0
  %253 = vmatprep.subr.mxu0 0.0
  %254 = vmatpush1.msra.mxu0 0.0
  %255 = vmatprep.subr.mxu0 0.0
  %256 = vmatpush1.msra.mxu0 0.0
  %257 = vmatprep.subr.mxu0 0.0
  %258 = vmatpush1.msra.mxu0 0.0
  %259 = vmatprep.subr.mxu0 0.0
  %260 = vmatpush1.msra.mxu0 0.0
  %261 = vmatprep.mubr.f32.mxu0 0.0
  %262 = vmatmul.mubr.f32.gmra.mrb[0].mxu0 %v182
  %v263 = vpop.f32.mrb[0].mxu0
  %v264 = vadd.f32 0.0, %v263
  %v265 = vpop.f32.mrb[0].mxu0
  %266 = vmatprep.mubr.f32.mxu0 0.0
  %267 = vmatmul.mubr.f32.gmra.mrb[0].mxu0 %v185
  %v268 = vpop.f32.mrb[0].mxu0
  %v269 = vadd.f32 0.0, %v268
  %v270 = vpop.f32.mrb[0].mxu0
  %271 = vmatprep.mubr.f32.mxu0 0.0
  %272 = vmatmul.mubr.f32.gmra.mrb[0].mxu0 %v188
  %v273 = vpop.f32.mrb[0].mxu0
  %v274 = vadd.f32 0.0, %v273
  %v275 = vpop.f32.mrb[0].mxu0
  %276 = vmatprep.mubr.f32.mxu0 0.0
  %277 = vmatmul.mubr.f32.gmra.mrb[0].mxu0 %v191
  %v278 = vpop.f32.mrb[0].mxu0
  %v279 = vadd.f32 0.0, %v278
  %v280 = vpop.f32.mrb[0].mxu0
  %281 = vdwg.mxu0
  %v282 = vmul.f32 %v32, %v264
  %v283 = vmul.f32 %v33, %v269
  %v284 = vadd.f32 %v282, %v274
  %v285 = vadd.f32 %v283, %v279
  %v286 = vmax.f32 %v284, 0.0
  %v287 = vmax.f32 %v285, 0.0
  %v288 = vld [vmem:[%s4] sm:$0xff]
  %v289 = vld [vmem:[%s5] sm:$0xff]
  %291 = vset.pattern.permute.xlu0 0
  %292 = vperm.xlu0 %291, %v289
  %v293 = vpop.permute.xlu0 %292
  %vm295 = vcmask 130048
  %v297 = vsel %vm295, %v288, 0
  %299 = vmatprep.subr.mxu0 0.0
  %300 = vmatpush1.msra.mxu0 %v286
  %301 = vmatprep.subr.mxu0 0.0
  %302 = vmatpush1.msra.mxu0 %v287
  %303 = vmatprep.subr.mxu0 0.0
  %304 = vmatpush1.msra.mxu0 0.0
  %305 = vmatprep.subr.mxu0 0.0
  %306 = vmatpush1.msra.mxu0 0.0
  %307 = vmatprep.subr.mxu0 0.0
  %308 = vmatpush1.msra.mxu0 0.0
  %309 = vmatprep.subr.mxu0 0.0
  %310 = vmatpush1.msra.mxu0 0.0
  %311 = vmatprep.subr.mxu0 0.0
  %312 = vmatpush1.msra.mxu0 0.0
  %313 = vmatprep.subr.mxu0 0.0
  %314 = vmatpush1.msra.mxu0 0.0
  %315 = vmatprep.subr.mxu0 0.0
  %316 = vmatpush1.msra.mxu0 0.0
  %317 = vmatprep.subr.mxu0 0.0
  %318 = vmatpush1.msra.mxu0 0.0
  %319 = vmatprep.subr.mxu0 0.0
  %320 = vmatpush1.msra.mxu0 0.0
  %321 = vmatprep.subr.mxu0 0.0
  %322 = vmatpush1.msra.mxu0 0.0
  %323 = vmatprep.subr.mxu0 0.0
  %324 = vmatpush1.msra.mxu0 0.0
  %325 = vmatprep.subr.mxu0 0.0
  %326 = vmatpush1.msra.mxu0 0.0
  %327 = vmatprep.subr.mxu0 0.0
  %328 = vmatpush1.msra.mxu0 0.0
  %329 = vmatprep.subr.mxu0 0.0
  %330 = vmatpush1.msra.mxu0 0.0
  %331 = vmatprep.subr.mxu0 0.0
  %332 = vmatpush1.msra.mxu0 0.0
  %333 = vmatprep.subr.mxu0 0.0
  %334 = vmatpush1.msra.mxu0 0.0
  %335 = vmatprep.subr.mxu0 0.0
  %336 = vmatpush1.msra.mxu0 0.0
  %337 = vmatprep.subr.mxu0 0.0
  %338 = vmatpush1.msra.mxu0 0.0
  %339 = vmatprep.subr.mxu0 0.0
  %340 = vmatpush1.msra.mxu0 0.0
  %341 = vmatprep.subr.mxu0 0.0
  %342 = vmatpush1.msra.mxu0 0.0
  %343 = vmatprep.subr.mxu0 0.0
  %344 = vmatpush1.msra.mxu0 0.0
  %345 = vmatprep.subr.mxu0 0.0
  %346 = vmatpush1.msra.mxu0 0.0
  %347 = vmatprep.subr.mxu0 0.0
  %348 = vmatpush1.msra.mxu0 0.0
  %349 = vmatprep.subr.mxu0 0.0
  %350 = vmatpush1.msra.mxu0 0.0
  %351 = vmatprep.subr.mxu0 0.0
  %352 = vmatpush1.msra.mxu0 0.0
  %353 = vmatprep.subr.mxu0 0.0
  %354 = vmatpush1.msra.mxu0 0.0
  %355 = vmatprep.subr.mxu0 0.0
  %356 = vmatpush1.msra.mxu0 0.0
  %357 = vmatprep.subr.mxu0 0.0
  %358 = vmatpush1.msra.mxu0 0.0
  %359 = vmatprep.subr.mxu0 0.0
  %360 = vmatpush1.msra.mxu0 0.0
  %361 = vmatprep.subr.mxu0 0.0
  %362 = vmatpush1.msra.mxu0 0.0
  %363 = vmatprep.mubr.f32.mxu0 0.0
  %364 = vmatmul.mubr.f32.gmra.mrb[0].mxu0 %v297
  %v365 = vpop.f32.mrb[0].mxu0
  %v366 = vadd.f32 %v293, %v365
  %v367 = vpop.f32.mrb[0].mxu0
  %368 = vdwg.mxu0
  %v369 = vrot.slane %v366, 4
  %v370 = vmax.f32 %v366, %v369
  %v371 = vrot.slane %v370, 2
  %v372 = vmax.f32 %v370, %v371
  %v373 = vrot.slane %v372, 1
  %v374 = vmax.f32 %v372, %v373
  %v375 = vsub.f32 %v366, %v374
  %v376 = vmul.f32 %v375, 1.442695
  %v377 = vpow.pop %v376
  %v378 = vrot.slane %v377, 4
  %v379 = vadd.f32 %v377, %v378
  %v380 = vrot.slane %v379, 2
  %v381 = vadd.f32 %v379, %v380
  %v382 = vrot.slane %v381, 1
  %v383 = vadd.f32 %v381, %v382
  %v384 = vrcp.pop %v383
  %v385 = vmul.f32 %v377, %v384
  %v386 = vld [vmem:[%s8] sm:$0xff]
  %v387 = vld [vmem:[%s8 + $0x8] sm:$0xff]
  %v388 = vmul.f32 %v385, %v386
  %v389 = vmul.f32 %v385, %v387
  %v390 = vld [vmem:[%s1] sm:$0xff]
  %v391 = vld [vmem:[%s1 + $0x8] sm:$0xff]
  %v392 = vld [vmem:[%s1 + $0x10] sm:$0xff]
  %v393 = vld [vmem:[%s1 + $0x18] sm:$0xff]
  %v395 = vsel %vm295, %v390, 0
  %v398 = vsel %vm295, %v391, 0
  %v401 = vsel %vm295, %v392, 0
  %v404 = vsel %vm295, %v393, 0
  %406 = vmatprep.subr.mxu0 0.0
  %407 = vmatpush1.msra.mxu0 %v388
  %408 = vmatprep.subr.mxu0 0.0
  %409 = vmatpush1.msra.mxu0 %v389
  %410 = vmatprep.subr.mxu0 0.0
  %411 = vmatpush1.msra.mxu0 0.0
  %412 = vmatprep.subr.mxu0 0.0
  %413 = vmatpush1.msra.mxu0 0.0
  %414 = vmatprep.subr.mxu0 0.0
  %415 = vmatpush1.msra.mxu0 0.0
  %416 = vmatprep.subr.mxu0 0.0
  %417 = vmatpush1.msra.mxu0 0.0
  %418 = vmatprep.subr.mxu0 0.0
  %419 = vmatpush1.msra.mxu0 0.0
  %420 = vmatprep.subr.mxu0 0.0
  %421 = vmatpush1.msra.mxu0 0.0
  %422 = vmatprep.subr.mxu0 0.0
  %423 = vmatpush1.msra.mxu0 0.0
  %424 = vmatprep.subr.mxu0 0.0
  %425 = vmatpush1.msra.mxu0 0.0
  %426 = vmatprep.subr.mxu0 0.0
  %427 = vmatpush1.msra.mxu0 0.0
  %428 = vmatprep.subr.mxu0 0.0
  %429 = vmatpush1.msra.mxu0 0.0
  %430 = vmatprep.subr.mxu0 0.0
  %431 = vmatpush1.msra.mxu0 0.0
  %432 = vmatprep.subr.mxu0 0.0
  %433 = vmatpush1.msra.mxu0 0.0
  %434 = vmatprep.subr.mxu0 0.0
  %435 = vmatpush1.msra.mxu0 0.0
  %436 = vmatprep.subr.mxu0 0.0
  %437 = vmatpush1.msra.mxu0 0.0
  %438 = vmatprep.subr.mxu0 0.0
  %439 = vmatpush1.msra.mxu0 0.0
  %440 = vmatprep.subr.mxu0 0.0
  %441 = vmatpush1.msra.mxu0 0.0
  %442 = vmatprep.subr.mxu0 0.0
  %443 = vmatpush1.msra.mxu0 0.0
  %444 = vmatprep.subr.mxu0 0.0
  %445 = vmatpush1.msra.mxu0 0.0
  %446 = vmatprep.subr.mxu0 0.0
  %447 = vmatpush1.msra.mxu0 0.0
  %448 = vmatprep.subr.mxu0 0.0
  %449 = vmatpush1.msra.mxu0 0.0
  %450 = vmatprep.subr.mxu0 0.0
  %451 = vmatpush1.msra.mxu0 0.0
  %452 = vmatprep.subr.mxu0 0.0
  %453 = vmatpush1.msra.mxu0 0.0
  %454 = vmatprep.subr.mxu0 0.0
  %455 = vmatpush1.msra.mxu0 0.0
  %456 = vmatprep.subr.mxu0 0.0
  %457 = vmatpush1.msra.mxu0 0.0
  %458 = vmatprep.subr.mxu0 0.0
  %459 = vmatpush1.msra.mxu0 0.0
  %460 = vmatprep.subr.mxu0 0.0
  %461 = vmatpush1.msra.mxu0 0.0
  %462 = vmatprep.subr.mxu0 0.0
  %463 = vmatpush1.msra.mxu0 0.0
  %464 = vmatprep.subr.mxu0 0.0
  %465 = vmatpush1.msra.mxu0 0.0
  %466 = vmatprep.subr.mxu0 0.0
  %467 = vmatpush1.msra.mxu0 0.0
  %468 = vmatprep.subr.mxu0 0.0
  %469 = vmatpush1.msra.mxu0 0.0
  %470 = vmatprep.mubr.f32.mxu0 0.0
  %471 = vmatmul.mubr.f32.gmra.mrb[0].mxu0 %v395
  %v472 = vpop.f32.mrb[0].mxu0
  %v473 = vadd.f32 0.0, %v472
  %v474 = vpop.f32.mrb[0].mxu0
  %475 = vmatprep.mubr.f32.mxu0 0.0
  %476 = vmatmul.mubr.f32.gmra.mrb[0].mxu0 %v398
  %v477 = vpop.f32.mrb[0].mxu0
  %v478 = vadd.f32 0.0, %v477
  %v479 = vpop.f32.mrb[0].mxu0
  %480 = vmatprep.mubr.f32.mxu0 0.0
  %481 = vmatmul.mubr.f32.gmra.mrb[0].mxu0 %v401
  %v482 = vpop.f32.mrb[0].mxu0
  %v483 = vadd.f32 0.0, %v482
  %v484 = vpop.f32.mrb[0].mxu0
  %485 = vmatprep.mubr.f32.mxu0 0.0
  %486 = vmatmul.mubr.f32.gmra.mrb[0].mxu0 %v404
  %v487 = vpop.f32.mrb[0].mxu0
  %v488 = vadd.f32 0.0, %v487
  %v489 = vpop.f32.mrb[0].mxu0
  %490 = vdwg.mxu0
  %491 = vst [vmem:[%s9] sm:$0xff] %v473
  %492 = vst [vmem:[%s9 + $0x8] sm:$0xff] %v478
  %493 = vst [vmem:[%s9 + $0x10] sm:$0xff] %v483
  %494 = vst [vmem:[%s9 + $0x18] sm:$0xff] %v488
  // Predicated region
  $region38: #{diff_unpool_forward.1} parent=0 // pred_check
    _
  $region39: #{diff_unpool_forward.1} parent=0 // pred_check_branch
    %496 = sbr.rel (0) target = $region41
  $region40: #{diff_unpool_forward.1} parent=0 // pred_region
    _
  $region41: #{diff_unpool_forward.1} parent=0 // pred_fallthru
    _
  // Predicated region
  $region42: #{diff_unpool_forward.1} parent=0 // pred_check
    _
  $region43: #{diff_unpool_forward.1} parent=0 // pred_check_branch
    %498 = sbr.rel (0) target = $region45
  $region44: #{diff_unpool_forward.1} parent=0 // pred_region
    _
  $region45: #{diff_unpool_forward.1} parent=0 // pred_fallthru
    _

</llo_original>
